<compile_context>
chip_gen: v7x
topology: tpu7x:2x2x1
jax: 0.10.0
libtpu: 0.0.40
codegen_flags: <defaults>
</compile_context>

<pallas_src>
import math

import jax
import jax.numpy as jnp
from jax.experimental import pallas as pl
from jax.experimental.pallas import tpu as pltpu

# Architecture from the PyTorch module
INPUT_SIZE = 5
HIDDEN_LAYERS = [90, 100, 80, 80, 80, 80, 60]
OUTPUT_SIZE = 1
LAYER_DIMS = [INPUT_SIZE] + HIDDEN_LAYERS + [OUTPUT_SIZE]   # 8 Linear layers
N_LAYERS = len(LAYER_DIMS) - 1                              # == 8

PAD = 128        # every feature dim zero-padded to one lane tile
SUBLANE = 8      # minimum sublane-aligned batch tile


def mlp_kernel(x_ref, w_ref, b_ref, o_ref):
    """Whole 8-layer MLP for one batch tile.

    x_ref : (TILE_B, 128)        f32 activations (zero-padded lanes)
    w_ref : (8, 128, 128)        bf16 packed weights, layer i at w_ref[i]
    b_ref : (8, 128)             f32 packed biases
    o_ref : (TILE_B, 128)        f32 output (only lane 0 is real)
    """
    b_all = b_ref[...]                       # (8, 128) f32, loaded once
    h = x_ref[...]                           # (TILE_B, 128) f32
    for i in range(N_LAYERS):                # fully unrolled, static indices
        w = w_ref[i]                         # (128, 128) bf16
        h = jnp.dot(h.astype(jnp.bfloat16), w,
                    preferred_element_type=jnp.float32)   # MXU, f32 accum
        h = h + b_all[i:i + 1, :]            # (TILE_B,128) + (1,128) in f32
        if i < N_LAYERS - 1:
            h = jnp.maximum(h, 0.0)          # ReLU on hidden layers only
    o_ref[...] = h


def init_params(key):
    """PyTorch-Linear-style init: U(-1/sqrt(fan_in), +1/sqrt(fan_in))."""
    ws, bs = [], []
    for i in range(N_LAYERS):
        fan_in, fan_out = LAYER_DIMS[i], LAYER_DIMS[i + 1]
        key, kw, kb = jax.random.split(key, 3)
        bound = 1.0 / math.sqrt(fan_in)
        # stored [in, out] (transposed vs torch's [out, in]) so h @ W works
        ws.append(jax.random.uniform(kw, (fan_in, fan_out), jnp.float32,
                                     -bound, bound))
        bs.append(jax.random.uniform(kb, (fan_out,), jnp.float32,
                                     -bound, bound))
    return ws, bs


def pack_params(ws, bs):
    """One-time packing/padding: (8,128,128) bf16 weights, (8,128) f32 biases.

    Padded rows/cols/biases are zero, so padded lanes stay exactly zero
    through every layer of the network.
    """
    w_packed = jnp.zeros((N_LAYERS, PAD, PAD), jnp.float32)
    b_packed = jnp.zeros((N_LAYERS, PAD), jnp.float32)
    for i, (w, b) in enumerate(zip(ws, bs)):
        w_packed = w_packed.at[i, :w.shape[0], :w.shape[1]].set(w)
        b_packed = b_packed.at[i, :b.shape[0]].set(b)
    return w_packed.astype(jnp.bfloat16), b_packed


def _pick_tile(batch):
    """Largest batch tile that amortizes per-step overhead; static at trace."""
    if batch >= 512:
        return 512
    if batch >= 128:
        return 128
    return SUBLANE


@jax.jit
def simple_nn_forward(x, w_packed, b_packed):
    """x: [batch, 5] f32 -> [batch, 1] f32."""
    batch = x.shape[0]
    tile_b = _pick_tile(batch)
    padded_batch = ((batch + tile_b - 1) // tile_b) * tile_b
    grid = (padded_batch // tile_b,)

    # zero-pad rows to padded_batch and lanes to 128 (fuses under jit)
    x_pad = jnp.pad(x, ((0, padded_batch - batch), (0, PAD - INPUT_SIZE)))

    flops = 2 * padded_batch * N_LAYERS * PAD * PAD
    bytes_accessed = (w_packed.size * 2 + b_packed.size * 4
                      + 2 * padded_batch * PAD * 4)

    out_pad = pl.pallas_call(
        mlp_kernel,
        out_shape=jax.ShapeDtypeStruct((padded_batch, PAD), jnp.float32),
        grid=grid,
        in_specs=[
            pl.BlockSpec((tile_b, PAD), lambda i: (i, 0)),            # x tile
            pl.BlockSpec((N_LAYERS, PAD, PAD), lambda i: (0, 0, 0)),  # weights (VMEM-resident)
            pl.BlockSpec((N_LAYERS, PAD), lambda i: (0, 0)),          # biases  (VMEM-resident)
        ],
        out_specs=pl.BlockSpec((tile_b, PAD), lambda i: (i, 0)),
        compiler_params=pltpu.CompilerParams(
            dimension_semantics=("parallel",),
        ),
        cost_estimate=pl.CostEstimate(
            flops=flops, transcendentals=0, bytes_accessed=bytes_accessed),
    )(x_pad, w_packed, b_packed)

    return out_pad[:batch, :OUTPUT_SIZE]


def reference_forward(x, w_packed, b_packed):
    """Pure-JAX reference with identical numerics (bf16 MXU operands)."""
    batch = x.shape[0]
    h = jnp.zeros((batch, PAD), jnp.float32).at[:, :INPUT_SIZE].set(x)
    for i in range(N_LAYERS):
        h = jnp.dot(h.astype(jnp.bfloat16), w_packed[i],
                    preferred_element_type=jnp.float32)
        h = h + b_packed[i:i + 1, :]
        if i < N_LAYERS - 1:
            h = jnp.maximum(h, 0.0)
    return h[:, :OUTPUT_SIZE]


if __name__ == "__main__":
    key = jax.random.PRNGKey(0)
    key, kx = jax.random.split(key)
    batch = 2
    x = jax.random.normal(kx, (batch, INPUT_SIZE), jnp.float32)

    ws, bs = init_params(jax.random.PRNGKey(0))
    w_packed, b_packed = pack_params(ws, bs)          # padded/packed ONCE

    out = simple_nn_forward(x, w_packed, b_packed)
    out = jax.block_until_ready(out)

    ref = reference_forward(x, w_packed, b_packed)
    assert out.shape == (batch, OUTPUT_SIZE), out.shape
    assert jnp.allclose(out, ref, atol=1e-3, rtol=1e-3), (out, ref)

    print("KERNEL_OK")
</pallas_src>

<mosaic_0001>
module attributes {stable_mosaic.version = 11 : i64} {
  func.func @mlp_kernel(%arg0: i32, %arg1: memref<8x128xf32, #tpu.memory_space<vmem>>, %arg2: memref<8x128x128xbf16, #tpu.memory_space<vmem>>, %arg3: memref<8x128xf32, #tpu.memory_space<vmem>>, %arg4: memref<8x128xf32, #tpu.memory_space<vmem>>) attributes {dimension_semantics = [#tpu.dimension_semantics<parallel>], iteration_bounds = array<i64: 1>, scalar_prefetch = 0 : i64, scratch_operands = 0 : i64, tpu.core_type = #tpu.core_type<tc>, window_params = [{transform_indices = @transform_0, window_bounds = array<i64: 8, 128>}, {pipeline_mode = #tpu.pipeline_mode<synchronous>, transform_indices = @transform_1, window_bounds = array<i64: 8, 128, 128>}, {pipeline_mode = #tpu.pipeline_mode<synchronous>, transform_indices = @transform_2, window_bounds = array<i64: 8, 128>}, {transform_indices = @transform_3, window_bounds = array<i64: 8, 128>}]} {
    %c0 = arith.constant 0 : index
    %c0_0 = arith.constant 0 : index
    %0 = vector.load %arg3[%c0, %c0_0] : memref<8x128xf32, #tpu.memory_space<vmem>>, vector<8x128xf32>
    %c0_1 = arith.constant 0 : index
    %c0_2 = arith.constant 0 : index
    %1 = vector.load %arg1[%c0_1, %c0_2] : memref<8x128xf32, #tpu.memory_space<vmem>>, vector<8x128xf32>
    %c0_3 = arith.constant 0 : index
    %c0_4 = arith.constant 0 : index
    %c0_5 = arith.constant 0 : index
    %2 = vector.load %arg2[%c0_3, %c0_4, %c0_5] : memref<8x128x128xbf16, #tpu.memory_space<vmem>>, vector<1x128x128xbf16>
    %3 = vector.shape_cast %2 : vector<1x128x128xbf16> to vector<128x128xbf16>
    %4 = arith.truncf %1 : vector<8x128xf32> to vector<8x128xbf16>
    %cst = arith.constant dense<0.000000e+00> : vector<8x128xf32>
    %5 = tpu.matmul %4, %3, %cst {dimension_numbers = #tpu.dot_dimension_numbers<[1], [0], [0], [1], [0, 0, 1, 1], [], []>} : vector<8x128xbf16>, vector<128x128xbf16>, vector<8x128xf32> -> vector<8x128xf32>
    %6 = vector.extract_strided_slice %0 {offsets = [0, 0], sizes = [1, 128], strides = [1, 1]} : vector<8x128xf32> to vector<1x128xf32>
    %7 = vector.broadcast %6 : vector<1x128xf32> to vector<8x128xf32>
    %8 = arith.addf %5, %7 : vector<8x128xf32>
    %cst_6 = arith.constant 0.000000e+00 : f32
    %9 = vector.broadcast %cst_6 : f32 to vector<8x128xf32>
    %10 = arith.maximumf %8, %9 : vector<8x128xf32>
    %c1 = arith.constant 1 : index
    %c0_7 = arith.constant 0 : index
    %c0_8 = arith.constant 0 : index
    %11 = vector.load %arg2[%c1, %c0_7, %c0_8] : memref<8x128x128xbf16, #tpu.memory_space<vmem>>, vector<1x128x128xbf16>
    %12 = vector.shape_cast %11 : vector<1x128x128xbf16> to vector<128x128xbf16>
    %13 = arith.truncf %10 : vector<8x128xf32> to vector<8x128xbf16>
    %cst_9 = arith.constant dense<0.000000e+00> : vector<8x128xf32>
    %14 = tpu.matmul %13, %12, %cst_9 {dimension_numbers = #tpu.dot_dimension_numbers<[1], [0], [0], [1], [0, 0, 1, 1], [], []>} : vector<8x128xbf16>, vector<128x128xbf16>, vector<8x128xf32> -> vector<8x128xf32>
    %15 = vector.extract_strided_slice %0 {offsets = [1, 0], sizes = [1, 128], strides = [1, 1]} : vector<8x128xf32> to vector<1x128xf32>
    %16 = vector.broadcast %15 : vector<1x128xf32> to vector<8x128xf32>
    %17 = arith.addf %14, %16 : vector<8x128xf32>
    %cst_10 = arith.constant 0.000000e+00 : f32
    %18 = vector.broadcast %cst_10 : f32 to vector<8x128xf32>
    %19 = arith.maximumf %17, %18 : vector<8x128xf32>
    %c2 = arith.constant 2 : index
    %c0_11 = arith.constant 0 : index
    %c0_12 = arith.constant 0 : index
    %20 = vector.load %arg2[%c2, %c0_11, %c0_12] : memref<8x128x128xbf16, #tpu.memory_space<vmem>>, vector<1x128x128xbf16>
    %21 = vector.shape_cast %20 : vector<1x128x128xbf16> to vector<128x128xbf16>
    %22 = arith.truncf %19 : vector<8x128xf32> to vector<8x128xbf16>
    %cst_13 = arith.constant dense<0.000000e+00> : vector<8x128xf32>
    %23 = tpu.matmul %22, %21, %cst_13 {dimension_numbers = #tpu.dot_dimension_numbers<[1], [0], [0], [1], [0, 0, 1, 1], [], []>} : vector<8x128xbf16>, vector<128x128xbf16>, vector<8x128xf32> -> vector<8x128xf32>
    %24 = vector.extract_strided_slice %0 {offsets = [2, 0], sizes = [1, 128], strides = [1, 1]} : vector<8x128xf32> to vector<1x128xf32>
    %25 = vector.broadcast %24 : vector<1x128xf32> to vector<8x128xf32>
    %26 = arith.addf %23, %25 : vector<8x128xf32>
    %cst_14 = arith.constant 0.000000e+00 : f32
    %27 = vector.broadcast %cst_14 : f32 to vector<8x128xf32>
    %28 = arith.maximumf %26, %27 : vector<8x128xf32>
    %c3 = arith.constant 3 : index
    %c0_15 = arith.constant 0 : index
    %c0_16 = arith.constant 0 : index
    %29 = vector.load %arg2[%c3, %c0_15, %c0_16] : memref<8x128x128xbf16, #tpu.memory_space<vmem>>, vector<1x128x128xbf16>
    %30 = vector.shape_cast %29 : vector<1x128x128xbf16> to vector<128x128xbf16>
    %31 = arith.truncf %28 : vector<8x128xf32> to vector<8x128xbf16>
    %cst_17 = arith.constant dense<0.000000e+00> : vector<8x128xf32>
    %32 = tpu.matmul %31, %30, %cst_17 {dimension_numbers = #tpu.dot_dimension_numbers<[1], [0], [0], [1], [0, 0, 1, 1], [], []>} : vector<8x128xbf16>, vector<128x128xbf16>, vector<8x128xf32> -> vector<8x128xf32>
    %33 = vector.extract_strided_slice %0 {offsets = [3, 0], sizes = [1, 128], strides = [1, 1]} : vector<8x128xf32> to vector<1x128xf32>
    %34 = vector.broadcast %33 : vector<1x128xf32> to vector<8x128xf32>
    %35 = arith.addf %32, %34 : vector<8x128xf32>
    %cst_18 = arith.constant 0.000000e+00 : f32
    %36 = vector.broadcast %cst_18 : f32 to vector<8x128xf32>
    %37 = arith.maximumf %35, %36 : vector<8x128xf32>
    %c4 = arith.constant 4 : index
    %c0_19 = arith.constant 0 : index
    %c0_20 = arith.constant 0 : index
    %38 = vector.load %arg2[%c4, %c0_19, %c0_20] : memref<8x128x128xbf16, #tpu.memory_space<vmem>>, vector<1x128x128xbf16>
    %39 = vector.shape_cast %38 : vector<1x128x128xbf16> to vector<128x128xbf16>
    %40 = arith.truncf %37 : vector<8x128xf32> to vector<8x128xbf16>
    %cst_21 = arith.constant dense<0.000000e+00> : vector<8x128xf32>
    %41 = tpu.matmul %40, %39, %cst_21 {dimension_numbers = #tpu.dot_dimension_numbers<[1], [0], [0], [1], [0, 0, 1, 1], [], []>} : vector<8x128xbf16>, vector<128x128xbf16>, vector<8x128xf32> -> vector<8x128xf32>
    %42 = vector.extract_strided_slice %0 {offsets = [4, 0], sizes = [1, 128], strides = [1, 1]} : vector<8x128xf32> to vector<1x128xf32>
    %43 = vector.broadcast %42 : vector<1x128xf32> to vector<8x128xf32>
    %44 = arith.addf %41, %43 : vector<8x128xf32>
    %cst_22 = arith.constant 0.000000e+00 : f32
    %45 = vector.broadcast %cst_22 : f32 to vector<8x128xf32>
    %46 = arith.maximumf %44, %45 : vector<8x128xf32>
    %c5 = arith.constant 5 : index
    %c0_23 = arith.constant 0 : index
    %c0_24 = arith.constant 0 : index
    %47 = vector.load %arg2[%c5, %c0_23, %c0_24] : memref<8x128x128xbf16, #tpu.memory_space<vmem>>, vector<1x128x128xbf16>
    %48 = vector.shape_cast %47 : vector<1x128x128xbf16> to vector<128x128xbf16>
    %49 = arith.truncf %46 : vector<8x128xf32> to vector<8x128xbf16>
    %cst_25 = arith.constant dense<0.000000e+00> : vector<8x128xf32>
    %50 = tpu.matmul %49, %48, %cst_25 {dimension_numbers = #tpu.dot_dimension_numbers<[1], [0], [0], [1], [0, 0, 1, 1], [], []>} : vector<8x128xbf16>, vector<128x128xbf16>, vector<8x128xf32> -> vector<8x128xf32>
    %51 = vector.extract_strided_slice %0 {offsets = [5, 0], sizes = [1, 128], strides = [1, 1]} : vector<8x128xf32> to vector<1x128xf32>
    %52 = vector.broadcast %51 : vector<1x128xf32> to vector<8x128xf32>
    %53 = arith.addf %50, %52 : vector<8x128xf32>
    %cst_26 = arith.constant 0.000000e+00 : f32
    %54 = vector.broadcast %cst_26 : f32 to vector<8x128xf32>
    %55 = arith.maximumf %53, %54 : vector<8x128xf32>
    %c6 = arith.constant 6 : index
    %c0_27 = arith.constant 0 : index
    %c0_28 = arith.constant 0 : index
    %56 = vector.load %arg2[%c6, %c0_27, %c0_28] : memref<8x128x128xbf16, #tpu.memory_space<vmem>>, vector<1x128x128xbf16>
    %57 = vector.shape_cast %56 : vector<1x128x128xbf16> to vector<128x128xbf16>
    %58 = arith.truncf %55 : vector<8x128xf32> to vector<8x128xbf16>
    %cst_29 = arith.constant dense<0.000000e+00> : vector<8x128xf32>
    %59 = tpu.matmul %58, %57, %cst_29 {dimension_numbers = #tpu.dot_dimension_numbers<[1], [0], [0], [1], [0, 0, 1, 1], [], []>} : vector<8x128xbf16>, vector<128x128xbf16>, vector<8x128xf32> -> vector<8x128xf32>
    %60 = vector.extract_strided_slice %0 {offsets = [6, 0], sizes = [1, 128], strides = [1, 1]} : vector<8x128xf32> to vector<1x128xf32>
    %61 = vector.broadcast %60 : vector<1x128xf32> to vector<8x128xf32>
    %62 = arith.addf %59, %61 : vector<8x128xf32>
    %cst_30 = arith.constant 0.000000e+00 : f32
    %63 = vector.broadcast %cst_30 : f32 to vector<8x128xf32>
    %64 = arith.maximumf %62, %63 : vector<8x128xf32>
    %c7 = arith.constant 7 : index
    %c0_31 = arith.constant 0 : index
    %c0_32 = arith.constant 0 : index
    %65 = vector.load %arg2[%c7, %c0_31, %c0_32] : memref<8x128x128xbf16, #tpu.memory_space<vmem>>, vector<1x128x128xbf16>
    %66 = vector.shape_cast %65 : vector<1x128x128xbf16> to vector<128x128xbf16>
    %67 = arith.truncf %64 : vector<8x128xf32> to vector<8x128xbf16>
    %cst_33 = arith.constant dense<0.000000e+00> : vector<8x128xf32>
    %68 = tpu.matmul %67, %66, %cst_33 {dimension_numbers = #tpu.dot_dimension_numbers<[1], [0], [0], [1], [0, 0, 1, 1], [], []>} : vector<8x128xbf16>, vector<128x128xbf16>, vector<8x128xf32> -> vector<8x128xf32>
    %69 = vector.extract_strided_slice %0 {offsets = [7, 0], sizes = [1, 128], strides = [1, 1]} : vector<8x128xf32> to vector<1x128xf32>
    %70 = vector.broadcast %69 : vector<1x128xf32> to vector<8x128xf32>
    %71 = arith.addf %68, %70 : vector<8x128xf32>
    %c0_34 = arith.constant 0 : index
    %c0_35 = arith.constant 0 : index
    %72 = vector.load %arg4[%c0_34, %c0_35] : memref<8x128xf32, #tpu.memory_space<vmem>>, vector<8x128xf32>
    tpu.vector_store %arg4[%c0_34, %c0_35], %71 {strides = array<i32>} : memref<8x128xf32, #tpu.memory_space<vmem>>, vector<8x128xf32>,
    return
  }
  func.func @transform_0(%arg0: i32) -> (i32, i32) {
    %c0_i32 = arith.constant 0 : i32
    %c0_i32_0 = arith.constant 0 : i32
    return %arg0, %c0_i32 : i32, i32
  }
  func.func @transform_1(%arg0: i32) -> (i32, i32, i32) {
    %c0_i32 = arith.constant 0 : i32
    %c0_i32_0 = arith.constant 0 : i32
    %c0_i32_1 = arith.constant 0 : i32
    %c0_i32_2 = arith.constant 0 : i32
    return %c0_i32, %c0_i32_0, %c0_i32_1 : i32, i32, i32
  }
  func.func @transform_2(%arg0: i32) -> (i32, i32) {
    %c0_i32 = arith.constant 0 : i32
    %c0_i32_0 = arith.constant 0 : i32
    %c0_i32_1 = arith.constant 0 : i32
    return %c0_i32, %c0_i32_0 : i32, i32
  }
  func.func @transform_3(%arg0: i32) -> (i32, i32) {
    %c0_i32 = arith.constant 0 : i32
    %c0_i32_0 = arith.constant 0 : i32
    return %arg0, %c0_i32 : i32, i32
  }
}

</mosaic_0001>

<llo_original>
// kernel: simple_nn_forward.1
$region0: #{simple_nn_forward.1}
  #allocation0 [shape = 'u32[]', space=smem, size = 0x4, offset = 0x4, fixed_abs, tag = 'smem constant byte address 0x4 - core index']
  #allocation1 [shape = 'u32[144,128]{1,0:T(1,128)}', space=vmem, size = 0x12000, scoped, tag = 'internal scratch']
  %s0 = inlined_call_operand.vmem [shape: f32[8,128], index: 0, kind: input, shape index: {}]
  %s1 = inlined_call_operand.hbm [shape: bf16[8,128,128], index: 1, kind: input, shape index: {}]
  %s2 = inlined_call_operand.vmem [shape: f32[8,128], index: 2, kind: input, shape index: {}]
  %s3 = inlined_call_operand.vmem [shape: f32[8,128], index: 3, kind: output, shape index: {}]
  %s4 = sld [smem:[#allocation0]]
  $region26: #{simple_nn_forward.1} parent=0
    _
  %s6 = ssub.s32 1, %s4
  %s7 = scalar_select 0, %s6, %s4
  $region1: #{simple_nn_forward.1} parent=0
    #allocation2 [shape = 'u8[262144]{0}', space=vmem, size = 0x40000, scoped, tag = 'input window, operand 1, single buffered']
    #allocation3 [shape = 's32[1]{0}', space=sflag, size = 0x4, scoped, tag = 'scoped memory for simple_nn_forward.1']
    %8 = vsyncpa [#allocation3], 0
    // Predicated region
    $region2: #{simple_nn_forward.1} parent=1 // pred_check
      _
    $region3: #{simple_nn_forward.1} parent=1 // pred_check_branch
      %10 = sbr.rel (0) target = $region5
    $region4: #{simple_nn_forward.1} parent=1 // pred_region
      _
    $region5: #{simple_nn_forward.1} parent=1 // pred_fallthru
      _
    // Predicated region
    $region6: #{simple_nn_forward.1} parent=1 // pred_check
      _
    $region7: #{simple_nn_forward.1} parent=1 // pred_check_branch
      %12 = sbr.rel (0) target = $region9
    $region8: #{simple_nn_forward.1} parent=1 // pred_region
      %s14 = ssub.s32 8192, 8192
      %15 = vsyncadd [#allocation3], %s14
      %s16 = sshll.u32 [#allocation2], 4
      %s17 = int_to_ptr.vmem [resolvable:$true] %s16
      %22 = dma.hbm_to_vmem [thread:$0]  %s1, 8192, %s17, [#allocation3], 64, 64, 4
    $region9: #{simple_nn_forward.1} parent=1 // pred_fallthru
      _
    // Predicated region
    $region10: #{simple_nn_forward.1} parent=1 // pred_check
      _
    $region11: #{simple_nn_forward.1} parent=1 // pred_check_branch
      %24 = sbr.rel (0) target = $region13
    $region12: #{simple_nn_forward.1} parent=1 // pred_region
      _
    $region13: #{simple_nn_forward.1} parent=1 // pred_fallthru
      _
    // Predicated region
    $region14: #{simple_nn_forward.1} parent=1 // pred_check
      _
    $region15: #{simple_nn_forward.1} parent=1 // pred_check_branch
      %26 = sbr.rel (0) target = $region17
    $region16: #{simple_nn_forward.1} parent=1 // pred_region
      %27 = dma.done [#allocation3], 8192
    $region17: #{simple_nn_forward.1} parent=1 // pred_fallthru
      _
    %v29 = vld [vmem:[%s2] sm:$0xff]
    %v30 = vld [vmem:[%s0] sm:$0xff]
    %v31 = vld [vmem:[#allocation2] sm:$0xf]
    %v32 = vld [vmem:[#allocation2 + $0x4] sm:$0xf]
    %v33 = vld [vmem:[#allocation2 + $0x8] sm:$0xf]
    %v34 = vld [vmem:[#allocation2 + $0xc] sm:$0xf]
    %v35 = vld [vmem:[#allocation2 + $0x10] sm:$0xf]
    %v36 = vld [vmem:[#allocation2 + $0x14] sm:$0xf]
    %v37 = vld [vmem:[#allocation2 + $0x18] sm:$0xf]
    %v38 = vld [vmem:[#allocation2 + $0x1c] sm:$0xf]
    %v39 = vld [vmem:[#allocation2 + $0x20] sm:$0xf]
    %v40 = vld [vmem:[#allocation2 + $0x24] sm:$0xf]
    %v41 = vld [vmem:[#allocation2 + $0x28] sm:$0xf]
    %v42 = vld [vmem:[#allocation2 + $0x2c] sm:$0xf]
    %v43 = vld [vmem:[#allocation2 + $0x30] sm:$0xf]
    %v44 = vld [vmem:[#allocation2 + $0x34] sm:$0xf]
    %v45 = vld [vmem:[#allocation2 + $0x38] sm:$0xf]
    %v46 = vld [vmem:[#allocation2 + $0x3c] sm:$0xf]
    %v47 = vpack.c.bf16 %v30, %v30
    %v48 = vlaneseq
    %v49 = vshrl.u32 %v48, 7
    %v50 = vsub.s32 0, %v49
    %v51 = vrot.slane %v29, %v50
    %v68 = vunpack.c.l.b16 %v31
    %v69 = vunpack.c.l.b16 %v32
    %v70 = vunpack.c.l.b16 %v33
    %v71 = vunpack.c.l.b16 %v34
    %v72 = vunpack.c.l.b16 %v35
    %v73 = vunpack.c.l.b16 %v36
    %v74 = vunpack.c.l.b16 %v37
    %v75 = vunpack.c.l.b16 %v38
    %v76 = vunpack.c.l.b16 %v39
    %v77 = vunpack.c.l.b16 %v40
    %v78 = vunpack.c.l.b16 %v41
    %v79 = vunpack.c.l.b16 %v42
    %v80 = vunpack.c.l.b16 %v43
    %v81 = vunpack.c.l.b16 %v44
    %v82 = vunpack.c.l.b16 %v45
    %v83 = vunpack.c.l.b16 %v46
    %v84 = vpack.c.b16 %v69, %v68
    %v85 = vpack.c.b16 %v71, %v70
    %v86 = vpack.c.b16 %v73, %v72
    %v87 = vpack.c.b16 %v75, %v74
    %v88 = vpack.c.b16 %v77, %v76
    %v89 = vpack.c.b16 %v79, %v78
    %v90 = vpack.c.b16 %v81, %v80
    %v91 = vpack.c.b16 %v83, %v82
    %100 = vmatprep.subr.bf16.mxu0 0
    %101 = vmatpush1.bf16.msra.mxu0 %v84
    %102 = vmatprep.subr.bf16.mxu0 0
    %103 = vmatpush1.bf16.msra.mxu0 %v85
    %104 = vmatprep.subr.bf16.mxu0 0
    %105 = vmatpush1.bf16.msra.mxu0 %v86
    %106 = vmatprep.subr.bf16.mxu0 0
    %107 = vmatpush1.bf16.msra.mxu0 %v87
    %108 = vmatprep.subr.bf16.mxu0 0
    %109 = vmatpush1.bf16.msra.mxu0 %v88
    %110 = vmatprep.subr.bf16.mxu0 0
    %111 = vmatpush1.bf16.msra.mxu0 %v89
    %112 = vmatprep.subr.bf16.mxu0 0
    %113 = vmatpush1.bf16.msra.mxu0 %v90
    %114 = vmatprep.subr.bf16.mxu0 0
    %115 = vmatpush1.bf16.msra.mxu0 %v91
    %116 = vmatprep.subr.bf16.mxu0 0
    %117 = vmatpush1.bf16.msra.mxu0 0
    %118 = vmatprep.subr.bf16.mxu0 0
    %119 = vmatpush1.bf16.msra.mxu0 0
    %120 = vmatprep.subr.bf16.mxu0 0
    %121 = vmatpush1.bf16.msra.mxu0 0
    %122 = vmatprep.subr.bf16.mxu0 0
    %123 = vmatpush1.bf16.msra.mxu0 0
    %124 = vmatprep.subr.bf16.mxu0 0
    %125 = vmatpush1.bf16.msra.mxu0 0
    %126 = vmatprep.subr.bf16.mxu0 0
    %127 = vmatpush1.bf16.msra.mxu0 0
    %128 = vmatprep.subr.bf16.mxu0 0
    %129 = vmatpush1.bf16.msra.mxu0 0
    %130 = vmatprep.subr.bf16.mxu0 0
    %131 = vmatpush1.bf16.msra.mxu0 0
    %132 = vmatprep.mubr.bf16.mxu0 0
    %133 = vmatmul.mubr.bf16.gmra.mrb[0].mxu0 %v47
    %v134 = vpop.f32.mrb[0].mxu0
    %v135 = vadd.f32 %v51, %v134
    %v136 = vpop.f32.mrb[0].mxu0
    %v137 = vpop.f32.mrb[0].mxu0
    %v138 = vpop.f32.mrb[0].mxu0
    %139 = vdwg.mxu0
    %v140 = vmax.f32 %v135, 0.0
    %s141 = scalar_lea.vmem [#allocation2], 64
    %v142 = vld [vmem:[%s141] sm:$0xf]
    %v143 = vld [vmem:[%s141 + $0x4] sm:$0xf]
    %v144 = vld [vmem:[%s141 + $0x8] sm:$0xf]
    %v145 = vld [vmem:[%s141 + $0xc] sm:$0xf]
    %v146 = vld [vmem:[%s141 + $0x10] sm:$0xf]
    %v147 = vld [vmem:[%s141 + $0x14] sm:$0xf]
    %v148 = vld [vmem:[%s141 + $0x18] sm:$0xf]
    %v149 = vld [vmem:[%s141 + $0x1c] sm:$0xf]
    %v150 = vld [vmem:[%s141 + $0x20] sm:$0xf]
    %v151 = vld [vmem:[%s141 + $0x24] sm:$0xf]
    %v152 = vld [vmem:[%s141 + $0x28] sm:$0xf]
    %v153 = vld [vmem:[%s141 + $0x2c] sm:$0xf]
    %v154 = vld [vmem:[%s141 + $0x30] sm:$0xf]
    %v155 = vld [vmem:[%s141 + $0x34] sm:$0xf]
    %v156 = vld [vmem:[%s141 + $0x38] sm:$0xf]
    %v157 = vld [vmem:[%s141 + $0x3c] sm:$0xf]
    %v158 = vpack.c.bf16 %v140, %v140
    %v159 = vlaneseq
    %v160 = vshrl.u32 %v159, 7
    %v161 = vsub.s32 1, %v160
    %v162 = vrot.slane %v29, %v161
    %v179 = vunpack.c.l.b16 %v142
    %v180 = vunpack.c.l.b16 %v143
    %v181 = vunpack.c.l.b16 %v144
    %v182 = vunpack.c.l.b16 %v145
    %v183 = vunpack.c.l.b16 %v146
    %v184 = vunpack.c.l.b16 %v147
    %v185 = vunpack.c.l.b16 %v148
    %v186 = vunpack.c.l.b16 %v149
    %v187 = vunpack.c.l.b16 %v150
    %v188 = vunpack.c.l.b16 %v151
    %v189 = vunpack.c.l.b16 %v152
    %v190 = vunpack.c.l.b16 %v153
    %v191 = vunpack.c.l.b16 %v154
    %v192 = vunpack.c.l.b16 %v155
    %v193 = vunpack.c.l.b16 %v156
    %v194 = vunpack.c.l.b16 %v157
    %v195 = vpack.c.b16 %v180, %v179
    %v196 = vpack.c.b16 %v182, %v181
    %v197 = vpack.c.b16 %v184, %v183
    %v198 = vpack.c.b16 %v186, %v185
    %v199 = vpack.c.b16 %v188, %v187
    %v200 = vpack.c.b16 %v190, %v189
    %v201 = vpack.c.b16 %v192, %v191
    %v202 = vpack.c.b16 %v194, %v193
    %211 = vmatprep.subr.bf16.mxu0 0
    %212 = vmatpush1.bf16.msra.mxu0 %v195
    %213 = vmatprep.subr.bf16.mxu0 0
    %214 = vmatpush1.bf16.msra.mxu0 %v196
    %215 = vmatprep.subr.bf16.mxu0 0
    %216 = vmatpush1.bf16.msra.mxu0 %v197
    %217 = vmatprep.subr.bf16.mxu0 0
    %218 = vmatpush1.bf16.msra.mxu0 %v198
    %219 = vmatprep.subr.bf16.mxu0 0
    %220 = vmatpush1.bf16.msra.mxu0 %v199
    %221 = vmatprep.subr.bf16.mxu0 0
    %222 = vmatpush1.bf16.msra.mxu0 %v200
    %223 = vmatprep.subr.bf16.mxu0 0
    %224 = vmatpush1.bf16.msra.mxu0 %v201
    %225 = vmatprep.subr.bf16.mxu0 0
    %226 = vmatpush1.bf16.msra.mxu0 %v202
    %227 = vmatprep.subr.bf16.mxu0 0
    %228 = vmatpush1.bf16.msra.mxu0 0
    %229 = vmatprep.subr.bf16.mxu0 0
    %230 = vmatpush1.bf16.msra.mxu0 0
    %231 = vmatprep.subr.bf16.mxu0 0
    %232 = vmatpush1.bf16.msra.mxu0 0
    %233 = vmatprep.subr.bf16.mxu0 0
    %234 = vmatpush1.bf16.msra.mxu0 0
    %235 = vmatprep.subr.bf16.mxu0 0
    %236 = vmatpush1.bf16.msra.mxu0 0
    %237 = vmatprep.subr.bf16.mxu0 0
    %238 = vmatpush1.bf16.msra.mxu0 0
    %239 = vmatprep.subr.bf16.mxu0 0
    %240 = vmatpush1.bf16.msra.mxu0 0
    %241 = vmatprep.subr.bf16.mxu0 0
    %242 = vmatpush1.bf16.msra.mxu0 0
    %243 = vmatprep.mubr.bf16.mxu0 0
    %244 = vmatmul.mubr.bf16.gmra.mrb[0].mxu0 %v158
    %v245 = vpop.f32.mrb[0].mxu0
    %v246 = vadd.f32 %v162, %v245
    %v247 = vpop.f32.mrb[0].mxu0
    %v248 = vpop.f32.mrb[0].mxu0
    %v249 = vpop.f32.mrb[0].mxu0
    %250 = vdwg.mxu0
    %v251 = vmax.f32 %v246, 0.0
    %s252 = scalar_lea.vmem [#allocation2], 128
    %v253 = vld [vmem:[%s252] sm:$0xf]
    %v254 = vld [vmem:[%s252 + $0x4] sm:$0xf]
    %v255 = vld [vmem:[%s252 + $0x8] sm:$0xf]
    %v256 = vld [vmem:[%s252 + $0xc] sm:$0xf]
    %v257 = vld [vmem:[%s252 + $0x10] sm:$0xf]
    %v258 = vld [vmem:[%s252 + $0x14] sm:$0xf]
    %v259 = vld [vmem:[%s252 + $0x18] sm:$0xf]
    %v260 = vld [vmem:[%s252 + $0x1c] sm:$0xf]
    %v261 = vld [vmem:[%s252 + $0x20] sm:$0xf]
    %v262 = vld [vmem:[%s252 + $0x24] sm:$0xf]
    %v263 = vld [vmem:[%s252 + $0x28] sm:$0xf]
    %v264 = vld [vmem:[%s252 + $0x2c] sm:$0xf]
    %v265 = vld [vmem:[%s252 + $0x30] sm:$0xf]
    %v266 = vld [vmem:[%s252 + $0x34] sm:$0xf]
    %v267 = vld [vmem:[%s252 + $0x38] sm:$0xf]
    %v268 = vld [vmem:[%s252 + $0x3c] sm:$0xf]
    %v269 = vpack.c.bf16 %v251, %v251
    %v270 = vlaneseq
    %v271 = vshrl.u32 %v270, 7
    %v272 = vsub.s32 2, %v271
    %v273 = vrot.slane %v29, %v272
    %v290 = vunpack.c.l.b16 %v253
    %v291 = vunpack.c.l.b16 %v254
    %v292 = vunpack.c.l.b16 %v255
    %v293 = vunpack.c.l.b16 %v256
    %v294 = vunpack.c.l.b16 %v257
    %v295 = vunpack.c.l.b16 %v258
    %v296 = vunpack.c.l.b16 %v259
    %v297 = vunpack.c.l.b16 %v260
    %v298 = vunpack.c.l.b16 %v261
    %v299 = vunpack.c.l.b16 %v262
    %v300 = vunpack.c.l.b16 %v263
    %v301 = vunpack.c.l.b16 %v264
    %v302 = vunpack.c.l.b16 %v265
    %v303 = vunpack.c.l.b16 %v266
    %v304 = vunpack.c.l.b16 %v267
    %v305 = vunpack.c.l.b16 %v268
    %v306 = vpack.c.b16 %v291, %v290
    %v307 = vpack.c.b16 %v293, %v292
    %v308 = vpack.c.b16 %v295, %v294
    %v309 = vpack.c.b16 %v297, %v296
    %v310 = vpack.c.b16 %v299, %v298
    %v311 = vpack.c.b16 %v301, %v300
    %v312 = vpack.c.b16 %v303, %v302
    %v313 = vpack.c.b16 %v305, %v304
    %322 = vmatprep.subr.bf16.mxu0 0
    %323 = vmatpush1.bf16.msra.mxu0 %v306
    %324 = vmatprep.subr.bf16.mxu0 0
    %325 = vmatpush1.bf16.msra.mxu0 %v307
    %326 = vmatprep.subr.bf16.mxu0 0
    %327 = vmatpush1.bf16.msra.mxu0 %v308
    %328 = vmatprep.subr.bf16.mxu0 0
    %329 = vmatpush1.bf16.msra.mxu0 %v309
    %330 = vmatprep.subr.bf16.mxu0 0
    %331 = vmatpush1.bf16.msra.mxu0 %v310
    %332 = vmatprep.subr.bf16.mxu0 0
    %333 = vmatpush1.bf16.msra.mxu0 %v311
    %334 = vmatprep.subr.bf16.mxu0 0
    %335 = vmatpush1.bf16.msra.mxu0 %v312
    %336 = vmatprep.subr.bf16.mxu0 0
    %337 = vmatpush1.bf16.msra.mxu0 %v313
    %338 = vmatprep.subr.bf16.mxu0 0
    %339 = vmatpush1.bf16.msra.mxu0 0
    %340 = vmatprep.subr.bf16.mxu0 0
    %341 = vmatpush1.bf16.msra.mxu0 0
    %342 = vmatprep.subr.bf16.mxu0 0
    %343 = vmatpush1.bf16.msra.mxu0 0
    %344 = vmatprep.subr.bf16.mxu0 0
    %345 = vmatpush1.bf16.msra.mxu0 0
    %346 = vmatprep.subr.bf16.mxu0 0
    %347 = vmatpush1.bf16.msra.mxu0 0
    %348 = vmatprep.subr.bf16.mxu0 0
    %349 = vmatpush1.bf16.msra.mxu0 0
    %350 = vmatprep.subr.bf16.mxu0 0
    %351 = vmatpush1.bf16.msra.mxu0 0
    %352 = vmatprep.subr.bf16.mxu0 0
    %353 = vmatpush1.bf16.msra.mxu0 0
    %354 = vmatprep.mubr.bf16.mxu0 0
    %355 = vmatmul.mubr.bf16.gmra.mrb[0].mxu0 %v269
    %v356 = vpop.f32.mrb[0].mxu0
    %v357 = vadd.f32 %v273, %v356
    %v358 = vpop.f32.mrb[0].mxu0
    %v359 = vpop.f32.mrb[0].mxu0
    %v360 = vpop.f32.mrb[0].mxu0
    %361 = vdwg.mxu0
    %v362 = vmax.f32 %v357, 0.0
    %s363 = scalar_lea.vmem [#allocation2], 192
    %v364 = vld [vmem:[%s363] sm:$0xf]
    %v365 = vld [vmem:[%s363 + $0x4] sm:$0xf]
    %v366 = vld [vmem:[%s363 + $0x8] sm:$0xf]
    %v367 = vld [vmem:[%s363 + $0xc] sm:$0xf]
    %v368 = vld [vmem:[%s363 + $0x10] sm:$0xf]
    %v369 = vld [vmem:[%s363 + $0x14] sm:$0xf]
    %v370 = vld [vmem:[%s363 + $0x18] sm:$0xf]
    %v371 = vld [vmem:[%s363 + $0x1c] sm:$0xf]
    %v372 = vld [vmem:[%s363 + $0x20] sm:$0xf]
    %v373 = vld [vmem:[%s363 + $0x24] sm:$0xf]
    %v374 = vld [vmem:[%s363 + $0x28] sm:$0xf]
    %v375 = vld [vmem:[%s363 + $0x2c] sm:$0xf]
    %v376 = vld [vmem:[%s363 + $0x30] sm:$0xf]
    %v377 = vld [vmem:[%s363 + $0x34] sm:$0xf]
    %v378 = vld [vmem:[%s363 + $0x38] sm:$0xf]
    %v379 = vld [vmem:[%s363 + $0x3c] sm:$0xf]
    %v380 = vpack.c.bf16 %v362, %v362
    %v381 = vlaneseq
    %v382 = vshrl.u32 %v381, 7
    %v383 = vsub.s32 3, %v382
    %v384 = vrot.slane %v29, %v383
    %v401 = vunpack.c.l.b16 %v364
    %v402 = vunpack.c.l.b16 %v365
    %v403 = vunpack.c.l.b16 %v366
    %v404 = vunpack.c.l.b16 %v367
    %v405 = vunpack.c.l.b16 %v368
    %v406 = vunpack.c.l.b16 %v369
    %v407 = vunpack.c.l.b16 %v370
    %v408 = vunpack.c.l.b16 %v371
    %v409 = vunpack.c.l.b16 %v372
    %v410 = vunpack.c.l.b16 %v373
    %v411 = vunpack.c.l.b16 %v374
    %v412 = vunpack.c.l.b16 %v375
    %v413 = vunpack.c.l.b16 %v376
    %v414 = vunpack.c.l.b16 %v377
    %v415 = vunpack.c.l.b16 %v378
    %v416 = vunpack.c.l.b16 %v379
    %v417 = vpack.c.b16 %v402, %v401
    %v418 = vpack.c.b16 %v404, %v403
    %v419 = vpack.c.b16 %v406, %v405
    %v420 = vpack.c.b16 %v408, %v407
    %v421 = vpack.c.b16 %v410, %v409
    %v422 = vpack.c.b16 %v412, %v411
    %v423 = vpack.c.b16 %v414, %v413
    %v424 = vpack.c.b16 %v416, %v415
    %433 = vmatprep.subr.bf16.mxu0 0
    %434 = vmatpush1.bf16.msra.mxu0 %v417
    %435 = vmatprep.subr.bf16.mxu0 0
    %436 = vmatpush1.bf16.msra.mxu0 %v418
    %437 = vmatprep.subr.bf16.mxu0 0
    %438 = vmatpush1.bf16.msra.mxu0 %v419
    %439 = vmatprep.subr.bf16.mxu0 0
    %440 = vmatpush1.bf16.msra.mxu0 %v420
    %441 = vmatprep.subr.bf16.mxu0 0
    %442 = vmatpush1.bf16.msra.mxu0 %v421
    %443 = vmatprep.subr.bf16.mxu0 0
    %444 = vmatpush1.bf16.msra.mxu0 %v422
    %445 = vmatprep.subr.bf16.mxu0 0
    %446 = vmatpush1.bf16.msra.mxu0 %v423
    %447 = vmatprep.subr.bf16.mxu0 0
    %448 = vmatpush1.bf16.msra.mxu0 %v424
    %449 = vmatprep.subr.bf16.mxu0 0
    %450 = vmatpush1.bf16.msra.mxu0 0
    %451 = vmatprep.subr.bf16.mxu0 0
    %452 = vmatpush1.bf16.msra.mxu0 0
    %453 = vmatprep.subr.bf16.mxu0 0
    %454 = vmatpush1.bf16.msra.mxu0 0
    %455 = vmatprep.subr.bf16.mxu0 0
    %456 = vmatpush1.bf16.msra.mxu0 0
    %457 = vmatprep.subr.bf16.mxu0 0
    %458 = vmatpush1.bf16.msra.mxu0 0
    %459 = vmatprep.subr.bf16.mxu0 0
    %460 = vmatpush1.bf16.msra.mxu0 0
    %461 = vmatprep.subr.bf16.mxu0 0
    %462 = vmatpush1.bf16.msra.mxu0 0
    %463 = vmatprep.subr.bf16.mxu0 0
    %464 = vmatpush1.bf16.msra.mxu0 0
    %465 = vmatprep.mubr.bf16.mxu0 0
    %466 = vmatmul.mubr.bf16.gmra.mrb[0].mxu0 %v380
    %v467 = vpop.f32.mrb[0].mxu0
    %v468 = vadd.f32 %v384, %v467
    %v469 = vpop.f32.mrb[0].mxu0
    %v470 = vpop.f32.mrb[0].mxu0
    %v471 = vpop.f32.mrb[0].mxu0
    %472 = vdwg.mxu0
    %v473 = vmax.f32 %v468, 0.0
    %s474 = scalar_lea.vmem [#allocation2], 256
    %v475 = vld [vmem:[%s474] sm:$0xf]
    %v476 = vld [vmem:[%s474 + $0x4] sm:$0xf]
    %v477 = vld [vmem:[%s474 + $0x8] sm:$0xf]
    %v478 = vld [vmem:[%s474 + $0xc] sm:$0xf]
    %v479 = vld [vmem:[%s474 + $0x10] sm:$0xf]
    %v480 = vld [vmem:[%s474 + $0x14] sm:$0xf]
    %v481 = vld [vmem:[%s474 + $0x18] sm:$0xf]
    %v482 = vld [vmem:[%s474 + $0x1c] sm:$0xf]
    %v483 = vld [vmem:[%s474 + $0x20] sm:$0xf]
    %v484 = vld [vmem:[%s474 + $0x24] sm:$0xf]
    %v485 = vld [vmem:[%s474 + $0x28] sm:$0xf]
    %v486 = vld [vmem:[%s474 + $0x2c] sm:$0xf]
    %v487 = vld [vmem:[%s474 + $0x30] sm:$0xf]
    %v488 = vld [vmem:[%s474 + $0x34] sm:$0xf]
    %v489 = vld [vmem:[%s474 + $0x38] sm:$0xf]
    %v490 = vld [vmem:[%s474 + $0x3c] sm:$0xf]
    %v491 = vpack.c.bf16 %v473, %v473
    %v492 = vlaneseq
    %v493 = vshrl.u32 %v492, 7
    %v494 = vsub.s32 4, %v493
    %v495 = vrot.slane %v29, %v494
    %v512 = vunpack.c.l.b16 %v475
    %v513 = vunpack.c.l.b16 %v476
    %v514 = vunpack.c.l.b16 %v477
    %v515 = vunpack.c.l.b16 %v478
    %v516 = vunpack.c.l.b16 %v479
    %v517 = vunpack.c.l.b16 %v480
    %v518 = vunpack.c.l.b16 %v481
    %v519 = vunpack.c.l.b16 %v482
    %v520 = vunpack.c.l.b16 %v483
    %v521 = vunpack.c.l.b16 %v484
    %v522 = vunpack.c.l.b16 %v485
    %v523 = vunpack.c.l.b16 %v486
    %v524 = vunpack.c.l.b16 %v487
    %v525 = vunpack.c.l.b16 %v488
    %v526 = vunpack.c.l.b16 %v489
    %v527 = vunpack.c.l.b16 %v490
    %v528 = vpack.c.b16 %v513, %v512
    %v529 = vpack.c.b16 %v515, %v514
    %v530 = vpack.c.b16 %v517, %v516
    %v531 = vpack.c.b16 %v519, %v518
    %v532 = vpack.c.b16 %v521, %v520
    %v533 = vpack.c.b16 %v523, %v522
    %v534 = vpack.c.b16 %v525, %v524
    %v535 = vpack.c.b16 %v527, %v526
    %544 = vmatprep.subr.bf16.mxu0 0
    %545 = vmatpush1.bf16.msra.mxu0 %v528
    %546 = vmatprep.subr.bf16.mxu0 0
    %547 = vmatpush1.bf16.msra.mxu0 %v529
    %548 = vmatprep.subr.bf16.mxu0 0
    %549 = vmatpush1.bf16.msra.mxu0 %v530
    %550 = vmatprep.subr.bf16.mxu0 0
    %551 = vmatpush1.bf16.msra.mxu0 %v531
    %552 = vmatprep.subr.bf16.mxu0 0
    %553 = vmatpush1.bf16.msra.mxu0 %v532
    %554 = vmatprep.subr.bf16.mxu0 0
    %555 = vmatpush1.bf16.msra.mxu0 %v533
    %556 = vmatprep.subr.bf16.mxu0 0
    %557 = vmatpush1.bf16.msra.mxu0 %v534
    %558 = vmatprep.subr.bf16.mxu0 0
    %559 = vmatpush1.bf16.msra.mxu0 %v535
    %560 = vmatprep.subr.bf16.mxu0 0
    %561 = vmatpush1.bf16.msra.mxu0 0
    %562 = vmatprep.subr.bf16.mxu0 0
    %563 = vmatpush1.bf16.msra.mxu0 0
    %564 = vmatprep.subr.bf16.mxu0 0
    %565 = vmatpush1.bf16.msra.mxu0 0
    %566 = vmatprep.subr.bf16.mxu0 0
    %567 = vmatpush1.bf16.msra.mxu0 0
    %568 = vmatprep.subr.bf16.mxu0 0
    %569 = vmatpush1.bf16.msra.mxu0 0
    %570 = vmatprep.subr.bf16.mxu0 0
    %571 = vmatpush1.bf16.msra.mxu0 0
    %572 = vmatprep.subr.bf16.mxu0 0
    %573 = vmatpush1.bf16.msra.mxu0 0
    %574 = vmatprep.subr.bf16.mxu0 0
    %575 = vmatpush1.bf16.msra.mxu0 0
    %576 = vmatprep.mubr.bf16.mxu0 0
    %577 = vmatmul.mubr.bf16.gmra.mrb[0].mxu0 %v491
    %v578 = vpop.f32.mrb[0].mxu0
    %v579 = vadd.f32 %v495, %v578
    %v580 = vpop.f32.mrb[0].mxu0
    %v581 = vpop.f32.mrb[0].mxu0
    %v582 = vpop.f32.mrb[0].mxu0
    %583 = vdwg.mxu0
    %v584 = vmax.f32 %v579, 0.0
    %s585 = scalar_lea.vmem [#allocation2], 320
    %v586 = vld [vmem:[%s585] sm:$0xf]
    %v587 = vld [vmem:[%s585 + $0x4] sm:$0xf]
    %v588 = vld [vmem:[%s585 + $0x8] sm:$0xf]
    %v589 = vld [vmem:[%s585 + $0xc] sm:$0xf]
    %v590 = vld [vmem:[%s585 + $0x10] sm:$0xf]
    %v591 = vld [vmem:[%s585 + $0x14] sm:$0xf]
    %v592 = vld [vmem:[%s585 + $0x18] sm:$0xf]
    %v593 = vld [vmem:[%s585 + $0x1c] sm:$0xf]
    %v594 = vld [vmem:[%s585 + $0x20] sm:$0xf]
    %v595 = vld [vmem:[%s585 + $0x24] sm:$0xf]
    %v596 = vld [vmem:[%s585 + $0x28] sm:$0xf]
    %v597 = vld [vmem:[%s585 + $0x2c] sm:$0xf]
    %v598 = vld [vmem:[%s585 + $0x30] sm:$0xf]
    %v599 = vld [vmem:[%s585 + $0x34] sm:$0xf]
    %v600 = vld [vmem:[%s585 + $0x38] sm:$0xf]
    %v601 = vld [vmem:[%s585 + $0x3c] sm:$0xf]
    %v602 = vpack.c.bf16 %v584, %v584
    %v603 = vlaneseq
    %v604 = vshrl.u32 %v603, 7
    %v605 = vsub.s32 5, %v604
    %v606 = vrot.slane %v29, %v605
    %v623 = vunpack.c.l.b16 %v586
    %v624 = vunpack.c.l.b16 %v587
    %v625 = vunpack.c.l.b16 %v588
    %v626 = vunpack.c.l.b16 %v589
    %v627 = vunpack.c.l.b16 %v590
    %v628 = vunpack.c.l.b16 %v591
    %v629 = vunpack.c.l.b16 %v592
    %v630 = vunpack.c.l.b16 %v593
    %v631 = vunpack.c.l.b16 %v594
    %v632 = vunpack.c.l.b16 %v595
    %v633 = vunpack.c.l.b16 %v596
    %v634 = vunpack.c.l.b16 %v597
    %v635 = vunpack.c.l.b16 %v598
    %v636 = vunpack.c.l.b16 %v599
    %v637 = vunpack.c.l.b16 %v600
    %v638 = vunpack.c.l.b16 %v601
    %v639 = vpack.c.b16 %v624, %v623
    %v640 = vpack.c.b16 %v626, %v625
    %v641 = vpack.c.b16 %v628, %v627
    %v642 = vpack.c.b16 %v630, %v629
    %v643 = vpack.c.b16 %v632, %v631
    %v644 = vpack.c.b16 %v634, %v633
    %v645 = vpack.c.b16 %v636, %v635
    %v646 = vpack.c.b16 %v638, %v637
    %655 = vmatprep.subr.bf16.mxu0 0
    %656 = vmatpush1.bf16.msra.mxu0 %v639
    %657 = vmatprep.subr.bf16.mxu0 0
    %658 = vmatpush1.bf16.msra.mxu0 %v640
    %659 = vmatprep.subr.bf16.mxu0 0
    %660 = vmatpush1.bf16.msra.mxu0 %v641
    %661 = vmatprep.subr.bf16.mxu0 0
    %662 = vmatpush1.bf16.msra.mxu0 %v642
    %663 = vmatprep.subr.bf16.mxu0 0
    %664 = vmatpush1.bf16.msra.mxu0 %v643
    %665 = vmatprep.subr.bf16.mxu0 0
    %666 = vmatpush1.bf16.msra.mxu0 %v644
    %667 = vmatprep.subr.bf16.mxu0 0
    %668 = vmatpush1.bf16.msra.mxu0 %v645
    %669 = vmatprep.subr.bf16.mxu0 0
    %670 = vmatpush1.bf16.msra.mxu0 %v646
    %671 = vmatprep.subr.bf16.mxu0 0
    %672 = vmatpush1.bf16.msra.mxu0 0
    %673 = vmatprep.subr.bf16.mxu0 0
    %674 = vmatpush1.bf16.msra.mxu0 0
    %675 = vmatprep.subr.bf16.mxu0 0
    %676 = vmatpush1.bf16.msra.mxu0 0
    %677 = vmatprep.subr.bf16.mxu0 0
    %678 = vmatpush1.bf16.msra.mxu0 0
    %679 = vmatprep.subr.bf16.mxu0 0
    %680 = vmatpush1.bf16.msra.mxu0 0
    %681 = vmatprep.subr.bf16.mxu0 0
    %682 = vmatpush1.bf16.msra.mxu0 0
    %683 = vmatprep.subr.bf16.mxu0 0
    %684 = vmatpush1.bf16.msra.mxu0 0
    %685 = vmatprep.subr.bf16.mxu0 0
    %686 = vmatpush1.bf16.msra.mxu0 0
    %687 = vmatprep.mubr.bf16.mxu0 0
    %688 = vmatmul.mubr.bf16.gmra.mrb[0].mxu0 %v602
    %v689 = vpop.f32.mrb[0].mxu0
    %v690 = vadd.f32 %v606, %v689
    %v691 = vpop.f32.mrb[0].mxu0
    %v692 = vpop.f32.mrb[0].mxu0
    %v693 = vpop.f32.mrb[0].mxu0
    %694 = vdwg.mxu0
    %v695 = vmax.f32 %v690, 0.0
    %s696 = scalar_lea.vmem [#allocation2], 384
    %v697 = vld [vmem:[%s696] sm:$0xf]
    %v698 = vld [vmem:[%s696 + $0x4] sm:$0xf]
    %v699 = vld [vmem:[%s696 + $0x8] sm:$0xf]
    %v700 = vld [vmem:[%s696 + $0xc] sm:$0xf]
    %v701 = vld [vmem:[%s696 + $0x10] sm:$0xf]
    %v702 = vld [vmem:[%s696 + $0x14] sm:$0xf]
    %v703 = vld [vmem:[%s696 + $0x18] sm:$0xf]
    %v704 = vld [vmem:[%s696 + $0x1c] sm:$0xf]
    %v705 = vld [vmem:[%s696 + $0x20] sm:$0xf]
    %v706 = vld [vmem:[%s696 + $0x24] sm:$0xf]
    %v707 = vld [vmem:[%s696 + $0x28] sm:$0xf]
    %v708 = vld [vmem:[%s696 + $0x2c] sm:$0xf]
    %v709 = vld [vmem:[%s696 + $0x30] sm:$0xf]
    %v710 = vld [vmem:[%s696 + $0x34] sm:$0xf]
    %v711 = vld [vmem:[%s696 + $0x38] sm:$0xf]
    %v712 = vld [vmem:[%s696 + $0x3c] sm:$0xf]
    %v713 = vpack.c.bf16 %v695, %v695
    %v714 = vlaneseq
    %v715 = vshrl.u32 %v714, 7
    %v716 = vsub.s32 6, %v715
    %v717 = vrot.slane %v29, %v716
    %v734 = vunpack.c.l.b16 %v697
    %v735 = vunpack.c.l.b16 %v698
    %v736 = vunpack.c.l.b16 %v699
    %v737 = vunpack.c.l.b16 %v700
    %v738 = vunpack.c.l.b16 %v701
    %v739 = vunpack.c.l.b16 %v702
    %v740 = vunpack.c.l.b16 %v703
    %v741 = vunpack.c.l.b16 %v704
    %v742 = vunpack.c.l.b16 %v705
    %v743 = vunpack.c.l.b16 %v706
    %v744 = vunpack.c.l.b16 %v707
    %v745 = vunpack.c.l.b16 %v708
    %v746 = vunpack.c.l.b16 %v709
    %v747 = vunpack.c.l.b16 %v710
    %v748 = vunpack.c.l.b16 %v711
    %v749 = vunpack.c.l.b16 %v712
    %v750 = vpack.c.b16 %v735, %v734
    %v751 = vpack.c.b16 %v737, %v736
    %v752 = vpack.c.b16 %v739, %v738
    %v753 = vpack.c.b16 %v741, %v740
    %v754 = vpack.c.b16 %v743, %v742
    %v755 = vpack.c.b16 %v745, %v744
    %v756 = vpack.c.b16 %v747, %v746
    %v757 = vpack.c.b16 %v749, %v748
    %766 = vmatprep.subr.bf16.mxu0 0
    %767 = vmatpush1.bf16.msra.mxu0 %v750
    %768 = vmatprep.subr.bf16.mxu0 0
    %769 = vmatpush1.bf16.msra.mxu0 %v751
    %770 = vmatprep.subr.bf16.mxu0 0
    %771 = vmatpush1.bf16.msra.mxu0 %v752
    %772 = vmatprep.subr.bf16.mxu0 0
    %773 = vmatpush1.bf16.msra.mxu0 %v753
    %774 = vmatprep.subr.bf16.mxu0 0
    %775 = vmatpush1.bf16.msra.mxu0 %v754
    %776 = vmatprep.subr.bf16.mxu0 0
    %777 = vmatpush1.bf16.msra.mxu0 %v755
    %778 = vmatprep.subr.bf16.mxu0 0
    %779 = vmatpush1.bf16.msra.mxu0 %v756
    %780 = vmatprep.subr.bf16.mxu0 0
    %781 = vmatpush1.bf16.msra.mxu0 %v757
    %782 = vmatprep.subr.bf16.mxu0 0
    %783 = vmatpush1.bf16.msra.mxu0 0
    %784 = vmatprep.subr.bf16.mxu0 0
    %785 = vmatpush1.bf16.msra.mxu0 0
    %786 = vmatprep.subr.bf16.mxu0 0
    %787 = vmatpush1.bf16.msra.mxu0 0
    %788 = vmatprep.subr.bf16.mxu0 0
    %789 = vmatpush1.bf16.msra.mxu0 0
    %790 = vmatprep.subr.bf16.mxu0 0
    %791 = vmatpush1.bf16.msra.mxu0 0
    %792 = vmatprep.subr.bf16.mxu0 0
    %793 = vmatpush1.bf16.msra.mxu0 0
    %794 = vmatprep.subr.bf16.mxu0 0
    %795 = vmatpush1.bf16.msra.mxu0 0
    %796 = vmatprep.subr.bf16.mxu0 0
    %797 = vmatpush1.bf16.msra.mxu0 0
    %798 = vmatprep.mubr.bf16.mxu0 0
    %799 = vmatmul.mubr.bf16.gmra.mrb[0].mxu0 %v713
    %v800 = vpop.f32.mrb[0].mxu0
    %v801 = vadd.f32 %v717, %v800
    %v802 = vpop.f32.mrb[0].mxu0
    %v803 = vpop.f32.mrb[0].mxu0
    %v804 = vpop.f32.mrb[0].mxu0
    %805 = vdwg.mxu0
    %v806 = vmax.f32 %v801, 0.0
    %s807 = scalar_lea.vmem [#allocation2], 448
    %v808 = vld [vmem:[%s807] sm:$0xf]
    %v809 = vld [vmem:[%s807 + $0x4] sm:$0xf]
    %v810 = vld [vmem:[%s807 + $0x8] sm:$0xf]
    %v811 = vld [vmem:[%s807 + $0xc] sm:$0xf]
    %v812 = vld [vmem:[%s807 + $0x10] sm:$0xf]
    %v813 = vld [vmem:[%s807 + $0x14] sm:$0xf]
    %v814 = vld [vmem:[%s807 + $0x18] sm:$0xf]
    %v815 = vld [vmem:[%s807 + $0x1c] sm:$0xf]
    %v816 = vld [vmem:[%s807 + $0x20] sm:$0xf]
    %v817 = vld [vmem:[%s807 + $0x24] sm:$0xf]
    %v818 = vld [vmem:[%s807 + $0x28] sm:$0xf]
    %v819 = vld [vmem:[%s807 + $0x2c] sm:$0xf]
    %v820 = vld [vmem:[%s807 + $0x30] sm:$0xf]
    %v821 = vld [vmem:[%s807 + $0x34] sm:$0xf]
    %v822 = vld [vmem:[%s807 + $0x38] sm:$0xf]
    %v823 = vld [vmem:[%s807 + $0x3c] sm:$0xf]
    %v824 = vpack.c.bf16 %v806, %v806
    %v825 = vlaneseq
    %v826 = vshrl.u32 %v825, 7
    %v827 = vsub.s32 7, %v826
    %v828 = vrot.slane %v29, %v827
    %v845 = vunpack.c.l.b16 %v808
    %v846 = vunpack.c.l.b16 %v809
    %v847 = vunpack.c.l.b16 %v810
    %v848 = vunpack.c.l.b16 %v811
    %v849 = vunpack.c.l.b16 %v812
    %v850 = vunpack.c.l.b16 %v813
    %v851 = vunpack.c.l.b16 %v814
    %v852 = vunpack.c.l.b16 %v815
    %v853 = vunpack.c.l.b16 %v816
    %v854 = vunpack.c.l.b16 %v817
    %v855 = vunpack.c.l.b16 %v818
    %v856 = vunpack.c.l.b16 %v819
    %v857 = vunpack.c.l.b16 %v820
    %v858 = vunpack.c.l.b16 %v821
    %v859 = vunpack.c.l.b16 %v822
    %v860 = vunpack.c.l.b16 %v823
    %v861 = vpack.c.b16 %v846, %v845
    %v862 = vpack.c.b16 %v848, %v847
    %v863 = vpack.c.b16 %v850, %v849
    %v864 = vpack.c.b16 %v852, %v851
    %v865 = vpack.c.b16 %v854, %v853
    %v866 = vpack.c.b16 %v856, %v855
    %v867 = vpack.c.b16 %v858, %v857
    %v868 = vpack.c.b16 %v860, %v859
    %877 = vmatprep.subr.bf16.mxu0 0
    %878 = vmatpush1.bf16.msra.mxu0 %v861
    %879 = vmatprep.subr.bf16.mxu0 0
    %880 = vmatpush1.bf16.msra.mxu0 %v862
    %881 = vmatprep.subr.bf16.mxu0 0
    %882 = vmatpush1.bf16.msra.mxu0 %v863
    %883 = vmatprep.subr.bf16.mxu0 0
    %884 = vmatpush1.bf16.msra.mxu0 %v864
    %885 = vmatprep.subr.bf16.mxu0 0
    %886 = vmatpush1.bf16.msra.mxu0 %v865
    %887 = vmatprep.subr.bf16.mxu0 0
    %888 = vmatpush1.bf16.msra.mxu0 %v866
    %889 = vmatprep.subr.bf16.mxu0 0
    %890 = vmatpush1.bf16.msra.mxu0 %v867
    %891 = vmatprep.subr.bf16.mxu0 0
    %892 = vmatpush1.bf16.msra.mxu0 %v868
    %893 = vmatprep.subr.bf16.mxu0 0
    %894 = vmatpush1.bf16.msra.mxu0 0
    %895 = vmatprep.subr.bf16.mxu0 0
    %896 = vmatpush1.bf16.msra.mxu0 0
    %897 = vmatprep.subr.bf16.mxu0 0
    %898 = vmatpush1.bf16.msra.mxu0 0
    %899 = vmatprep.subr.bf16.mxu0 0
    %900 = vmatpush1.bf16.msra.mxu0 0
    %901 = vmatprep.subr.bf16.mxu0 0
    %902 = vmatpush1.bf16.msra.mxu0 0
    %903 = vmatprep.subr.bf16.mxu0 0
    %904 = vmatpush1.bf16.msra.mxu0 0
    %905 = vmatprep.subr.bf16.mxu0 0
    %906 = vmatpush1.bf16.msra.mxu0 0
    %907 = vmatprep.subr.bf16.mxu0 0
    %908 = vmatpush1.bf16.msra.mxu0 0
    %909 = vmatprep.mubr.bf16.mxu0 0
    %910 = vmatmul.mubr.bf16.gmra.mrb[0].mxu0 %v824
    %v911 = vpop.f32.mrb[0].mxu0
    %v912 = vadd.f32 %v828, %v911
    %v913 = vpop.f32.mrb[0].mxu0
    %v914 = vpop.f32.mrb[0].mxu0
    %v915 = vpop.f32.mrb[0].mxu0
    %916 = vdwg.mxu0
    %917 = vst [vmem:[%s3] sm:$0xff] %v912
    // Predicated region
    $region18: #{simple_nn_forward.1} parent=1 // pred_check
      _
    $region19: #{simple_nn_forward.1} parent=1 // pred_check_branch
      %919 = sbr.rel (0) target = $region21
    $region20: #{simple_nn_forward.1} parent=1 // pred_region
      _
    $region21: #{simple_nn_forward.1} parent=1 // pred_fallthru
      _
    // Predicated region
    $region22: #{simple_nn_forward.1} parent=1 // pred_check
      _
    $region23: #{simple_nn_forward.1} parent=1 // pred_check_branch
      %921 = sbr.rel (0) target = $region25
    $region24: #{simple_nn_forward.1} parent=1 // pred_region
      _
    $region25: #{simple_nn_forward.1} parent=1 // pred_fallthru
      _
    %922 = vsyncpa [#allocation3], 1

</llo_original>
